<compile_context>
chip_gen: v6e
topology: v6e:2x2x1
jax: 0.10.0
libtpu: 0.0.40
codegen_flags: <defaults>
</compile_context>

<pallas_src>
import functools

import jax
import jax.numpy as jnp
from jax.experimental import pallas as pl
from jax.experimental.pallas import tpu as pltpu


def policy_kernel(x_ref, w1_ref, b1_ref, w2_ref, b2_ref, o_ref):
    # bf16 operands into the MXU, f32 accumulation.
    x = x_ref[...].astype(jnp.bfloat16)                          # [TB, in]
    w1 = w1_ref[...].astype(jnp.bfloat16)                        # [in, 64]
    h = jnp.dot(x, w1, preferred_element_type=jnp.float32) + b1_ref[...]
    h = jnp.maximum(h, 0.0)                                      # f32 ReLU, [TB, 64]

    logits = jnp.dot(h.astype(jnp.bfloat16),
                     w2_ref[...].astype(jnp.bfloat16),
                     preferred_element_type=jnp.float32) + b2_ref[...]  # [TB, out]

    # Numerically-stable softmax: max/sum are XLU cross-lane reduces, exp is
    # EUP, subtract/multiply are VPU -> the block co-issues across VLIW slots.
    m = jnp.max(logits, axis=-1, keepdims=True)
    e = jnp.exp(logits - m)
    denom = jnp.sum(e, axis=-1, keepdims=True)
    o_ref[...] = (e * pl.reciprocal(denom, approx=True)).astype(o_ref.dtype)


def _round_up(x, m):
    return ((x + m - 1) // m) * m


@functools.partial(jax.jit, static_argnames=("block_rows",))
def policy_forward(x, w1, b1, w2, b2, *, block_rows=512):
    batch, in_size = x.shape
    hidden = w1.shape[1]
    out_size = w2.shape[1]

    # Batch tile: sublane-aligned (multiple of 8), capped at block_rows.
    tb = min(_round_up(batch, 8), _round_up(block_rows, 8))
    pad = (-batch) % tb
    if pad:
        x = jnp.pad(x, ((0, pad), (0, 0)))       # padded rows sliced off below
    padded = batch + pad
    grid = (padded // tb,)

    dsize = jnp.dtype(jnp.float32).itemsize
    cost = pl.CostEstimate(
        flops=2 * padded * (in_size * hidden + hidden * out_size),
        transcendentals=padded * (out_size + 1),     # exp per logit + reciprocal
        bytes_accessed=dsize * (padded * (in_size + out_size)
                                + in_size * hidden + hidden
                                + hidden * out_size + out_size),
    )

    out = pl.pallas_call(
        policy_kernel,
        out_shape=jax.ShapeDtypeStruct((padded, out_size), jnp.float32),
        grid=grid,
        in_specs=[
            pl.BlockSpec((tb, in_size), lambda i: (i, 0)),       # x: batch-tiled
            pl.BlockSpec((in_size, hidden), lambda i: (0, 0)),   # w1 pinned in VMEM
            pl.BlockSpec((1, hidden), lambda i: (0, 0)),         # b1 pinned
            pl.BlockSpec((hidden, out_size), lambda i: (0, 0)),  # w2 pinned
            pl.BlockSpec((1, out_size), lambda i: (0, 0)),       # b2 pinned
        ],
        out_specs=pl.BlockSpec((tb, out_size), lambda i: (i, 0)),
        compiler_params=pltpu.CompilerParams(
            dimension_semantics=("parallel",),   # shard batch tiles across TCs (v7x)
        ),
        cost_estimate=cost,
    )(x, w1, b1, w2, b2)

    if pad:
        out = out[:batch]
    return out


def init_params(key, input_size, hidden, output_size):
    k1, k2, k3, k4 = jax.random.split(key, 4)
    # Deterministic init mimicking PyTorch's uniform(-1/sqrt(fan_in), 1/sqrt(fan_in)).
    # Weights stored as [in, out] so the kernel computes x @ W + b (== x @ W.T + b
    # for PyTorch's [out, in] layout).
    lim1 = 1.0 / jnp.sqrt(jnp.float32(input_size))
    lim2 = 1.0 / jnp.sqrt(jnp.float32(hidden))
    w1 = jax.random.uniform(k1, (input_size, hidden), jnp.float32, -lim1, lim1)
    b1 = jax.random.uniform(k2, (1, hidden), jnp.float32, -lim1, lim1)
    w2 = jax.random.uniform(k3, (hidden, output_size), jnp.float32, -lim2, lim2)
    b2 = jax.random.uniform(k4, (1, output_size), jnp.float32, -lim2, lim2)
    return w1, b1, w2, b2


if __name__ == "__main__":
    input_size = 32
    hidden = 64
    output_size = 16
    batch = 8

    key = jax.random.PRNGKey(0)
    kx, kp = jax.random.split(key)
    x = jax.random.normal(kx, (batch, input_size), jnp.float32)
    w1, b1, w2, b2 = init_params(kp, input_size, hidden, output_size)

    out = policy_forward(x, w1, b1, w2, b2)
    out = jax.block_until_ready(out)

    # Reference check in plain JAX (f32 end-to-end); kernel uses bf16 MXU inputs
    # and an approximate reciprocal, so tolerances are loosened accordingly.
    h_ref = jnp.maximum(x @ w1 + b1, 0.0)
    logits_ref = h_ref @ w2 + b2
    ref = jax.nn.softmax(logits_ref, axis=-1)
    assert out.shape == (batch, output_size)
    assert jnp.allclose(out, ref, atol=3e-2, rtol=3e-2)
    assert jnp.allclose(jnp.sum(out, axis=-1), 1.0, atol=1e-2)
    assert bool(jnp.all(out >= 0.0))

    print("KERNEL_OK")
</pallas_src>

<mosaic_0001>
module attributes {stable_mosaic.version = 11 : i64} {
  func.func @policy_kernel(%arg0: i32, %arg1: memref<8x32xf32, #tpu.memory_space<vmem>>, %arg2: memref<32x64xf32, #tpu.memory_space<vmem>>, %arg3: memref<1x64xf32, #tpu.memory_space<vmem>>, %arg4: memref<64x16xf32, #tpu.memory_space<vmem>>, %arg5: memref<1x16xf32, #tpu.memory_space<vmem>>, %arg6: memref<8x16xf32, #tpu.memory_space<vmem>>) attributes {dimension_semantics = [#tpu.dimension_semantics<parallel>], iteration_bounds = array<i64: 1>, scalar_prefetch = 0 : i64, scratch_operands = 0 : i64, tpu.core_type = #tpu.core_type<tc>, window_params = [{transform_indices = @transform_0, window_bounds = array<i64: 8, 32>}, {pipeline_mode = #tpu.pipeline_mode<synchronous>, transform_indices = @transform_1, window_bounds = array<i64: 32, 64>}, {pipeline_mode = #tpu.pipeline_mode<synchronous>, transform_indices = @transform_2, window_bounds = array<i64: 1, 64>}, {pipeline_mode = #tpu.pipeline_mode<synchronous>, transform_indices = @transform_3, window_bounds = array<i64: 64, 16>}, {pipeline_mode = #tpu.pipeline_mode<synchronous>, transform_indices = @transform_4, window_bounds = array<i64: 1, 16>}, {transform_indices = @transform_5, window_bounds = array<i64: 8, 16>}]} {
    %c0 = arith.constant 0 : index
    %c0_0 = arith.constant 0 : index
    %0 = vector.load %arg1[%c0, %c0_0] : memref<8x32xf32, #tpu.memory_space<vmem>>, vector<8x32xf32>
    %1 = arith.truncf %0 : vector<8x32xf32> to vector<8x32xbf16>
    %c0_1 = arith.constant 0 : index
    %c0_2 = arith.constant 0 : index
    %2 = vector.load %arg2[%c0_1, %c0_2] : memref<32x64xf32, #tpu.memory_space<vmem>>, vector<32x64xf32>
    %3 = arith.truncf %2 : vector<32x64xf32> to vector<32x64xbf16>
    %cst = arith.constant dense<0.000000e+00> : vector<8x64xf32>
    %4 = tpu.matmul %1, %3, %cst {dimension_numbers = #tpu.dot_dimension_numbers<[1], [0], [0], [1], [0, 0, 1, 1], [], []>} : vector<8x32xbf16>, vector<32x64xbf16>, vector<8x64xf32> -> vector<8x64xf32>
    %c0_3 = arith.constant 0 : index
    %c0_4 = arith.constant 0 : index
    %5 = vector.load %arg3[%c0_3, %c0_4] : memref<1x64xf32, #tpu.memory_space<vmem>>, vector<1x64xf32>
    %6 = vector.broadcast %5 : vector<1x64xf32> to vector<8x64xf32>
    %7 = arith.addf %4, %6 : vector<8x64xf32>
    %cst_5 = arith.constant 0.000000e+00 : f32
    %8 = vector.broadcast %cst_5 : f32 to vector<8x64xf32>
    %9 = arith.maximumf %7, %8 : vector<8x64xf32>
    %10 = arith.truncf %9 : vector<8x64xf32> to vector<8x64xbf16>
    %c0_6 = arith.constant 0 : index
    %c0_7 = arith.constant 0 : index
    %11 = vector.load %arg4[%c0_6, %c0_7] : memref<64x16xf32, #tpu.memory_space<vmem>>, vector<64x16xf32>
    %12 = arith.truncf %11 : vector<64x16xf32> to vector<64x16xbf16>
    %cst_8 = arith.constant dense<0.000000e+00> : vector<8x16xf32>
    %13 = tpu.matmul %10, %12, %cst_8 {dimension_numbers = #tpu.dot_dimension_numbers<[1], [0], [0], [1], [0, 0, 1, 1], [], []>} : vector<8x64xbf16>, vector<64x16xbf16>, vector<8x16xf32> -> vector<8x16xf32>
    %c0_9 = arith.constant 0 : index
    %c0_10 = arith.constant 0 : index
    %14 = vector.load %arg5[%c0_9, %c0_10] : memref<1x16xf32, #tpu.memory_space<vmem>>, vector<1x16xf32>
    %15 = vector.broadcast %14 : vector<1x16xf32> to vector<8x16xf32>
    %16 = arith.addf %13, %15 : vector<8x16xf32>
    %cst_11 = arith.constant dense<0xFF800000> : vector<8xf32>
    %17 = vector.multi_reduction <maximumf>, %16, %cst_11 [1] : vector<8x16xf32> to vector<8xf32>
    %18 = vector.shape_cast %17 : vector<8xf32> to vector<8x1xf32>
    %19 = vector.broadcast %18 : vector<8x1xf32> to vector<8x16xf32>
    %20 = arith.subf %16, %19 : vector<8x16xf32>
    %21 = math.exp %20 : vector<8x16xf32>
    %cst_12 = arith.constant dense<0.000000e+00> : vector<8xf32>
    %22 = vector.multi_reduction <add>, %21, %cst_12 [1] : vector<8x16xf32> to vector<8xf32>
    %23 = vector.shape_cast %22 : vector<8xf32> to vector<8x1xf32>
    %24 = tpu.reciprocal %23 {approx = true} : vector<8x1xf32> -> vector<8x1xf32>
    %25 = vector.broadcast %24 : vector<8x1xf32> to vector<8x16xf32>
    %26 = arith.mulf %21, %25 : vector<8x16xf32>
    %c0_13 = arith.constant 0 : index
    %c0_14 = arith.constant 0 : index
    %27 = vector.load %arg6[%c0_13, %c0_14] : memref<8x16xf32, #tpu.memory_space<vmem>>, vector<8x16xf32>
    tpu.vector_store %arg6[%c0_13, %c0_14], %26 {strides = array<i32>} : memref<8x16xf32, #tpu.memory_space<vmem>>, vector<8x16xf32>,
    return
  }
  func.func @transform_0(%arg0: i32) -> (i32, i32) {
    %c0_i32 = arith.constant 0 : i32
    %c0_i32_0 = arith.constant 0 : i32
    return %arg0, %c0_i32 : i32, i32
  }
  func.func @transform_1(%arg0: i32) -> (i32, i32) {
    %c0_i32 = arith.constant 0 : i32
    %c0_i32_0 = arith.constant 0 : i32
    %c0_i32_1 = arith.constant 0 : i32
    return %c0_i32, %c0_i32_0 : i32, i32
  }
  func.func @transform_2(%arg0: i32) -> (i32, i32) {
    %c0_i32 = arith.constant 0 : i32
    %c0_i32_0 = arith.constant 0 : i32
    %c0_i32_1 = arith.constant 0 : i32
    return %c0_i32, %c0_i32_0 : i32, i32
  }
  func.func @transform_3(%arg0: i32) -> (i32, i32) {
    %c0_i32 = arith.constant 0 : i32
    %c0_i32_0 = arith.constant 0 : i32
    %c0_i32_1 = arith.constant 0 : i32
    return %c0_i32, %c0_i32_0 : i32, i32
  }
  func.func @transform_4(%arg0: i32) -> (i32, i32) {
    %c0_i32 = arith.constant 0 : i32
    %c0_i32_0 = arith.constant 0 : i32
    %c0_i32_1 = arith.constant 0 : i32
    return %c0_i32, %c0_i32_0 : i32, i32
  }
  func.func @transform_5(%arg0: i32) -> (i32, i32) {
    %c0_i32 = arith.constant 0 : i32
    %c0_i32_0 = arith.constant 0 : i32
    return %arg0, %c0_i32 : i32, i32
  }
}

</mosaic_0001>

<llo_original>
// kernel: policy_forward.1
$region0: #{policy_forward.1}
  #allocation0 [shape = 'u32[]', space=smem, size = 0x4, offset = 0x4, fixed_abs, tag = 'smem constant byte address 0x4 - core index']
  #allocation1 [shape = 'u32[144,128]{1,0:T(1,128)}', space=vmem, size = 0x12000, scoped, tag = 'internal scratch']
  %s0 = inlined_call_operand.vmem [shape: f32[8,32], index: 0, kind: input, shape index: {}]
  %s1 = inlined_call_operand.vmem [shape: f32[32,64], index: 1, kind: input, shape index: {}]
  %s2 = inlined_call_operand.vmem [shape: f32[1,64], index: 2, kind: input, shape index: {}]
  %s3 = inlined_call_operand.vmem [shape: f32[64,16], index: 3, kind: input, shape index: {}]
  %s4 = inlined_call_operand.vmem [shape: f32[1,16], index: 4, kind: input, shape index: {}]
  %s5 = inlined_call_operand.hbm [shape: f32[8,16], index: 5, kind: output, shape index: {}]
  %s6 = sld [smem:[#allocation0]]
  $region30: #{policy_forward.1} parent=0
    _
  %s8 = ssub.s32 1, %s6
  %s9 = scalar_select 0, %s8, %s6
  $region1: #{policy_forward.1} parent=0
    #allocation2 [shape = 'u8[4096]{0}', space=vmem, size = 0x1000, scoped, tag = 'output window, operand 0, single buffered']
    #allocation3 [shape = 's32[1]{0}', space=sflag, size = 0x4, scoped, tag = 'scoped memory for policy_forward.1']
    %10 = vsyncpa [#allocation3], 0
    // Predicated region
    $region2: #{policy_forward.1} parent=1 // pred_check
      _
    $region3: #{policy_forward.1} parent=1 // pred_check_branch
      %12 = sbr.rel (0) target = $region5
    $region4: #{policy_forward.1} parent=1 // pred_region
      _
    $region5: #{policy_forward.1} parent=1 // pred_fallthru
      _
    // Predicated region
    $region6: #{policy_forward.1} parent=1 // pred_check
      _
    $region7: #{policy_forward.1} parent=1 // pred_check_branch
      %14 = sbr.rel (0) target = $region9
    $region8: #{policy_forward.1} parent=1 // pred_region
      _
    $region9: #{policy_forward.1} parent=1 // pred_fallthru
      _
    // Predicated region
    $region10: #{policy_forward.1} parent=1 // pred_check
      _
    $region11: #{policy_forward.1} parent=1 // pred_check_branch
      %16 = sbr.rel (0) target = $region13
    $region12: #{policy_forward.1} parent=1 // pred_region
      _
    $region13: #{policy_forward.1} parent=1 // pred_fallthru
      _
    // Predicated region
    $region14: #{policy_forward.1} parent=1 // pred_check
      _
    $region15: #{policy_forward.1} parent=1 // pred_check_branch
      %18 = sbr.rel (0) target = $region17
    $region16: #{policy_forward.1} parent=1 // pred_region
      _
    $region17: #{policy_forward.1} parent=1 // pred_fallthru
      _
    // Predicated region
    $region18: #{policy_forward.1} parent=1 // pred_check
      _
    $region19: #{policy_forward.1} parent=1 // pred_check_branch
      %20 = sbr.rel (0) target = $region21
    $region20: #{policy_forward.1} parent=1 // pred_region
      _
    $region21: #{policy_forward.1} parent=1 // pred_fallthru
      _
    %v22 = vld [vmem:[%s0] sm:$0xff]
    %v23 = vpack.c.bf16 %v22, %v22
    %v24 = vld [vmem:[%s1] sm:$0xff]
    %v25 = vld [vmem:[%s1 + $0x8] sm:$0xff]
    %v26 = vld [vmem:[%s1 + $0x10] sm:$0xff]
    %v27 = vld [vmem:[%s1 + $0x18] sm:$0xff]
    %v28 = vpack.c.bf16 %v25, %v24
    %v29 = vpack.c.bf16 %v27, %v26
    %v30 = vld [vmem:[%s2] sm:$0x1]
    %v32 = vlaneseq
    %v33 = vshrl.u32 %v32, 7
    %v34 = vsub.s32 0, %v33
    %v35 = vrot.slane %v30, %v34
    %vm37 = vcmask 261120
    %v39 = vsel %vm37, %v23, 0
    %41 = vmatprep.subr.bf16.mxu0 0
    %42 = vmatpush1.bf16.msra.mxu0 0
    %43 = vmatprep.subr.bf16.mxu0 0
    %44 = vmatpush1.bf16.msra.mxu0 0
    %45 = vmatprep.subr.bf16.mxu0 0
    %46 = vmatpush1.bf16.msra.mxu0 0
    %47 = vmatprep.subr.bf16.mxu0 0
    %48 = vmatpush1.bf16.msra.mxu0 0
    %49 = vmatprep.subr.bf16.mxu0 0
    %50 = vmatpush1.bf16.msra.mxu0 0
    %51 = vmatprep.subr.bf16.mxu0 0
    %52 = vmatpush1.bf16.msra.mxu0 0
    %53 = vmatprep.subr.bf16.mxu0 0
    %54 = vmatpush1.bf16.msra.mxu0 %v29
    %55 = vmatprep.subr.bf16.mxu0 0
    %56 = vmatpush1.bf16.msra.mxu0 %v28
    %57 = vmatprep.subr.bf16.mxu0 0
    %58 = vmatpush2.bf16.msra.mxu0 0
    %59 = vmatprep.subr.bf16.mxu0 0
    %60 = vmatpush2.bf16.msra.mxu0 0
    %61 = vmatprep.subr.bf16.mxu0 0
    %62 = vmatpush2.bf16.msra.mxu0 0
    %63 = vmatprep.subr.bf16.mxu0 0
    %64 = vmatpush2.bf16.msra.mxu0 0
    %65 = vmatprep.subr.bf16.mxu0 0
    %66 = vmatpush2.bf16.msra.mxu0 0
    %67 = vmatprep.subr.bf16.mxu0 0
    %68 = vmatpush2.bf16.msra.mxu0 0
    %69 = vmatprep.subr.bf16.mxu0 0
    %70 = vmatpush2.bf16.msra.mxu0 0
    %71 = vmatprep.subr.bf16.mxu0 0
    %72 = vmatpush2.bf16.msra.mxu0 0
    %73 = vmatprep.mubr.bf16.mxu0 0
    %74 = vmatmul.mubr.bf16.gmra.mxu0 %v39
    %v75 = vpop.f32.mrf.mxu0
    %v76 = vadd.f32 %v35, %v75
    %v77 = vpop.f32.mrf.mxu0
    %v78 = vpop.f32.mrf.mxu0
    %v79 = vpop.f32.mrf.mxu0
    %80 = vdwg.mxu0
    %v81 = vmax.f32 %v76, 0.0
    %v82 = vpack.c.bf16 %v81, %v81
    %v83 = vld [vmem:[%s3] sm:$0xff]
    %v84 = vld [vmem:[%s3 + $0x8] sm:$0xff]
    %v85 = vld [vmem:[%s3 + $0x10] sm:$0xff]
    %v86 = vld [vmem:[%s3 + $0x18] sm:$0xff]
    %v87 = vld [vmem:[%s3 + $0x20] sm:$0xff]
    %v88 = vld [vmem:[%s3 + $0x28] sm:$0xff]
    %v89 = vld [vmem:[%s3 + $0x30] sm:$0xff]
    %v90 = vld [vmem:[%s3 + $0x38] sm:$0xff]
    %v91 = vpack.c.bf16 %v84, %v83
    %v92 = vpack.c.bf16 %v86, %v85
    %v93 = vpack.c.bf16 %v88, %v87
    %v94 = vpack.c.bf16 %v90, %v89
    %v95 = vld [vmem:[%s4] sm:$0x1]
    %v97 = vlaneseq
    %v98 = vshrl.u32 %v97, 7
    %v99 = vsub.s32 0, %v98
    %v100 = vrot.slane %v95, %v99
    %vm102 = vcmask 523264
    %v104 = vsel %vm102, %v82, 0
    %106 = vmatprep.subr.bf16.mxu0 0
    %107 = vmatpush1.bf16.msra.mxu0 0
    %108 = vmatprep.subr.bf16.mxu0 0
    %109 = vmatpush1.bf16.msra.mxu0 0
    %110 = vmatprep.subr.bf16.mxu0 0
    %111 = vmatpush1.bf16.msra.mxu0 0
    %112 = vmatprep.subr.bf16.mxu0 0
    %113 = vmatpush1.bf16.msra.mxu0 0
    %114 = vmatprep.subr.bf16.mxu0 0
    %115 = vmatpush1.bf16.msra.mxu0 %v94
    %116 = vmatprep.subr.bf16.mxu0 0
    %117 = vmatpush1.bf16.msra.mxu0 %v93
    %118 = vmatprep.subr.bf16.mxu0 0
    %119 = vmatpush1.bf16.msra.mxu0 %v92
    %120 = vmatprep.subr.bf16.mxu0 0
    %121 = vmatpush1.bf16.msra.mxu0 %v91
    %122 = vmatprep.subr.bf16.mxu0 0
    %123 = vmatpush2.bf16.msra.mxu0 0
    %124 = vmatprep.subr.bf16.mxu0 0
    %125 = vmatpush2.bf16.msra.mxu0 0
    %126 = vmatprep.subr.bf16.mxu0 0
    %127 = vmatpush2.bf16.msra.mxu0 0
    %128 = vmatprep.subr.bf16.mxu0 0
    %129 = vmatpush2.bf16.msra.mxu0 0
    %130 = vmatprep.subr.bf16.mxu0 0
    %131 = vmatpush2.bf16.msra.mxu0 0
    %132 = vmatprep.subr.bf16.mxu0 0
    %133 = vmatpush2.bf16.msra.mxu0 0
    %134 = vmatprep.subr.bf16.mxu0 0
    %135 = vmatpush2.bf16.msra.mxu0 0
    %136 = vmatprep.subr.bf16.mxu0 0
    %137 = vmatpush2.bf16.msra.mxu0 0
    %138 = vmatprep.mubr.bf16.mxu0 0
    %139 = vmatmul.mubr.bf16.gmra.mxu0 %v104
    %v140 = vpop.f32.mrf.mxu0
    %v141 = vadd.f32 %v100, %v140
    %v142 = vpop.f32.mrf.mxu0
    %v143 = vpop.f32.mrf.mxu0
    %v144 = vpop.f32.mrf.mxu0
    %145 = vdwg.mxu0
    %vm146 = vcmask 130048
    %v147 = vsel %vm146, %v141, -inf
    %148 = vmax.xlane.f32.xlu0 %v147
    %v149 = vpop.xlane.xlu0 %148
    %v150 = vsub.f32 %v141, %v149
    %v151 = vmul.f32 %v150, 1.442695
    %v152 = vpow.pop %v151
    %v153 = vsel %vm146, %v152, 0.0
    %154 = vadd.xlane.f32.xlu0 %v153
    %v155 = vpop.xlane.xlu0 %154
    %v156 = vrcp.pop %v155
    %v157 = vmul.f32 %v152, %v156
    %158 = vst.msk [vmem:[#allocation2] sm:$0xff] %vm146, %v157
    // Predicated region
    $region22: #{policy_forward.1} parent=1 // pred_check
      _
    $region23: #{policy_forward.1} parent=1 // pred_check_branch
      %160 = sbr.rel (0) target = $region25
    $region24: #{policy_forward.1} parent=1 // pred_region
      %s162 = ssub.s32 128, 128
      %163 = vsyncadd [#allocation3], %s162
      %s165 = sshll.u32 [#allocation2], 4
      %s166 = int_to_ptr.vmem [resolvable:$true] %s165
      %168 = dma.vmem_to_hbm [thread:$0]  %s166, 128, %s5, [#allocation3]
    $region25: #{policy_forward.1} parent=1 // pred_fallthru
      _
    // Predicated region
    $region26: #{policy_forward.1} parent=1 // pred_check
      _
    $region27: #{policy_forward.1} parent=1 // pred_check_branch
      %170 = sbr.rel (0) target = $region29
    $region28: #{policy_forward.1} parent=1 // pred_region
      %171 = dma.done [#allocation3], 128
    $region29: #{policy_forward.1} parent=1 // pred_fallthru
      _
    %172 = vsyncpa [#allocation3], 1

</llo_original>
